<compile_context>
chip_gen: v6e
topology: v6e:2x2x1
jax: 0.10.0
libtpu: 0.0.40
codegen_flags: <defaults>
</compile_context>

<pallas_src>
import numpy as np
import jax
import jax.numpy as jnp
from jax.experimental import pallas as pl
from jax.experimental.pallas import tpu as pltpu


def _expert_clip_kernel(x_ref, stk_ref, ssp_ref, o_ref):
    # x_ref  : VMEM (Bb*T, WHp)   batch-folded, lane-dense (128-padded) frames
    # stk_ref: VMEM (Bb*t, Bb*T)  block-diag kron(I_Bb, St) 0/1 time selection
    #                             (zero rows = time zero-padding)
    # ssp_ref: VMEM (WHp, wh)     0/1 nearest-neighbour spatial selection
    #                             (zero rows for the lane padding)
    # o_ref  : VMEM (Bb*t, wh)    lane-dense output slab (wh multiple of 128)
    tmp = jnp.dot(stk_ref[...], x_ref[...],
                  preferred_element_type=jnp.float32)            # (Bb*t, WHp)
    out = jnp.dot(tmp.astype(ssp_ref.dtype), ssp_ref[...],
                  preferred_element_type=jnp.float32)            # (Bb*t, wh)
    o_ref[...] = out.astype(o_ref.dtype)


def _choose_block_batch(B, T, t, WHp, wh, elem_bytes, budget_bytes=8 << 20):
    """Pick Bb = batches folded per grid step.

    Constraints: divisor of B; (Bb*T, Bb*t) sublane dims multiples of 8 (or the
    whole array); per-step working set within a conservative VMEM budget.
    Preference: largest Bb that still leaves a grid of >= 2 steps (so the
    'parallel' axis can be sharded across the two TensorCores on v7x).
    """
    def sublane_ok(d):
        return ((d * T) % 8 == 0 and (d * t) % 8 == 0) or d == B

    def fits(d):
        x_bytes = 2 * d * T * WHp * elem_bytes       # double-buffered input
        o_bytes = 2 * d * t * wh * elem_bytes        # double-buffered output
        st_bytes = (d * t) * (d * T) * elem_bytes    # single-buffered constant
        sp_bytes = WHp * wh * elem_bytes             # single-buffered constant
        return x_bytes + o_bytes + st_bytes + sp_bytes <= budget_bytes

    cands = [d for d in range(1, B + 1) if B % d == 0 and sublane_ok(d) and fits(d)]
    if not cands:
        return B                                     # whole batch in one block
    multi = [d for d in cands if B // d >= 2]
    return max(multi) if multi else max(cands)


def expert_clip_pallas(x, scale_factor, tgt_sample):
    """Pallas implementation of ExpertClip.forward."""
    t, w, h = tgt_sample
    N, C, T, W, H = x.shape
    tgt_time_sp = int(t * scale_factor)
    # Number of output time steps that carry real data (rest are zero pad).
    # tgt_time_sp == 0 would make torch's F.interpolate error; here we simply
    # produce an all-zero output (no division below when valid_t == 0).
    valid_t = min(max(tgt_time_sp, 0), t)

    B = N * C
    WH = W * H
    wh = w * h
    WHp = ((WH + 127) // 128) * 128                  # lane-pad K dim to 128

    # PyTorch 'nearest' index rule: src = floor(dst * in / out), clamped.
    st = np.zeros((t, T), np.float32)
    for i in range(valid_t):
        st[i, min((i * T) // tgt_time_sp, T - 1)] = 1.0

    ssp = np.zeros((WHp, wh), np.float32)            # padded rows stay zero
    for j in range(w):
        wj = min((j * W) // w, W - 1)
        for k in range(h):
            hk = min((k * H) // h, H - 1)
            ssp[wj * H + hk, j * h + k] = 1.0

    elem_bytes = jnp.dtype(x.dtype).itemsize
    Bb = _choose_block_batch(B, T, t, WHp, wh, elem_bytes)
    grid = (B // Bb,)

    # Block-diagonal time selection covering Bb folded batches per grid step.
    stk = np.kron(np.eye(Bb, dtype=np.float32), st)  # (Bb*t, Bb*T)

    # Lane-dense HBM layout: one contiguous 128-multiple row per frame.
    xb = x.reshape(B * T, WH)
    if WHp != WH:
        xb = jnp.pad(xb, ((0, 0), (0, WHp - WH)))

    out = pl.pallas_call(
        _expert_clip_kernel,
        grid=grid,
        in_specs=[
            pl.BlockSpec((Bb * T, WHp), lambda i: (i, 0)),
            pl.BlockSpec((Bb * t, Bb * T), lambda i: (0, 0),
                         pipeline_mode=pl.Buffered(1)),   # constant, fetched once
            pl.BlockSpec((WHp, wh), lambda i: (0, 0),
                         pipeline_mode=pl.Buffered(1)),   # constant, fetched once
        ],
        out_specs=pl.BlockSpec((Bb * t, wh), lambda i: (i, 0)),
        out_shape=jax.ShapeDtypeStruct((B * t, wh), x.dtype),
        compiler_params=pltpu.CompilerParams(
            dimension_semantics=("parallel",),       # shard grid across TCs (v7x)
            vmem_limit_bytes=32 * 1024 * 1024,       # explicit; safe on v5e/v6e/v7x
        ),
    )(xb, jnp.asarray(stk, dtype=x.dtype), jnp.asarray(ssp, dtype=x.dtype))

    return out.reshape(N, C, t, w, h)


def expert_clip_reference(x, scale_factor, tgt_sample):
    """Pure-JAX reference matching torch semantics (nearest interpolate + clip/pad)."""
    t, w, h = tgt_sample
    N, C, T, W, H = x.shape
    ts = int(t * scale_factor)
    if ts <= 0:
        return jnp.zeros((N, C, t, w, h), x.dtype)
    ti = np.minimum((np.arange(ts) * T) // ts, T - 1)
    wi = np.minimum((np.arange(w) * W) // w, W - 1)
    hi = np.minimum((np.arange(h) * H) // h, H - 1)
    y = x[:, :, ti][:, :, :, wi][:, :, :, :, hi]
    if ts > t:
        y = y[:, :, :t]
    elif ts < t:
        pad = jnp.zeros((N, C, t - ts, w, h), x.dtype)
        y = jnp.concatenate([y, pad], axis=2)
    return y


if __name__ == "__main__":
    # ExpertClip has no learnable parameters; config chosen so the spatial
    # resize plus both the time-pad and time-clip paths are exercised.
    key = jax.random.PRNGKey(0)
    x = jax.random.normal(key, (2, 4, 12, 10, 12), dtype=jnp.float32)  # (N,C,T,W,H)
    tgt_sample = (8, 16, 16)   # (t, w, h) -> w*h = 256, lane-dense output

    # Case 1: tgt_time_sp = 6 < t = 8  -> zero-pad path.
    out = jax.block_until_ready(expert_clip_pallas(x, 0.75, tgt_sample))
    ref = expert_clip_reference(x, 0.75, tgt_sample)
    np.testing.assert_allclose(np.asarray(out), np.asarray(ref), rtol=0, atol=1e-6)
    assert out.shape == (2, 4, 8, 16, 16)

    # Case 2: tgt_time_sp = 12 > t = 8 -> clip path.
    out2 = jax.block_until_ready(expert_clip_pallas(x, 1.5, tgt_sample))
    ref2 = expert_clip_reference(x, 1.5, tgt_sample)
    np.testing.assert_allclose(np.asarray(out2), np.asarray(ref2), rtol=0, atol=1e-6)

    print("KERNEL_OK")
</pallas_src>

<mosaic_0001>
module attributes {stable_mosaic.version = 11 : i64} {
  func.func @_expert_clip_kernel(%arg0: i32, %arg1: memref<48x128xf32, #tpu.memory_space<vmem>>, %arg2: memref<32x48xf32, #tpu.memory_space<vmem>>, %arg3: memref<128x256xf32, #tpu.memory_space<vmem>>, %arg4: memref<32x256xf32, #tpu.memory_space<vmem>>) attributes {dimension_semantics = [#tpu.dimension_semantics<parallel>], iteration_bounds = array<i64: 2>, scalar_prefetch = 0 : i64, scratch_operands = 0 : i64, tpu.core_type = #tpu.core_type<tc>, window_params = [{transform_indices = @transform_0, window_bounds = array<i64: 48, 128>}, {pipeline_mode = #tpu.pipeline_mode<synchronous>, transform_indices = @transform_1, window_bounds = array<i64: 32, 48>}, {pipeline_mode = #tpu.pipeline_mode<synchronous>, transform_indices = @transform_2, window_bounds = array<i64: 128, 256>}, {transform_indices = @transform_3, window_bounds = array<i64: 32, 256>}]} {
    %c0 = arith.constant 0 : index
    %c0_0 = arith.constant 0 : index
    %0 = vector.load %arg2[%c0, %c0_0] : memref<32x48xf32, #tpu.memory_space<vmem>>, vector<32x48xf32>
    %c0_1 = arith.constant 0 : index
    %c0_2 = arith.constant 0 : index
    %1 = vector.load %arg1[%c0_1, %c0_2] : memref<48x128xf32, #tpu.memory_space<vmem>>, vector<48x128xf32>
    %cst = arith.constant dense<0.000000e+00> : vector<32x128xf32>
    %2 = tpu.matmul %0, %1, %cst {dimension_numbers = #tpu.dot_dimension_numbers<[1], [0], [0], [1], [0, 0, 1, 1], [], []>} : vector<32x48xf32>, vector<48x128xf32>, vector<32x128xf32> -> vector<32x128xf32>
    %c0_3 = arith.constant 0 : index
    %c0_4 = arith.constant 0 : index
    %3 = vector.load %arg3[%c0_3, %c0_4] : memref<128x256xf32, #tpu.memory_space<vmem>>, vector<128x256xf32>
    %cst_5 = arith.constant dense<0.000000e+00> : vector<32x256xf32>
    %4 = tpu.matmul %2, %3, %cst_5 {dimension_numbers = #tpu.dot_dimension_numbers<[1], [0], [0], [1], [0, 0, 1, 1], [], []>} : vector<32x128xf32>, vector<128x256xf32>, vector<32x256xf32> -> vector<32x256xf32>
    %c0_6 = arith.constant 0 : index
    %c0_7 = arith.constant 0 : index
    %5 = vector.load %arg4[%c0_6, %c0_7] : memref<32x256xf32, #tpu.memory_space<vmem>>, vector<32x256xf32>
    tpu.vector_store %arg4[%c0_6, %c0_7], %4 {strides = array<i32>} : memref<32x256xf32, #tpu.memory_space<vmem>>, vector<32x256xf32>,
    return
  }
  func.func @transform_0(%arg0: i32) -> (i32, i32) {
    %c0_i32 = arith.constant 0 : i32
    %c0_i32_0 = arith.constant 0 : i32
    return %arg0, %c0_i32 : i32, i32
  }
  func.func @transform_1(%arg0: i32) -> (i32, i32) {
    %c0_i32 = arith.constant 0 : i32
    %c0_i32_0 = arith.constant 0 : i32
    %c0_i32_1 = arith.constant 0 : i32
    return %c0_i32, %c0_i32_0 : i32, i32
  }
  func.func @transform_2(%arg0: i32) -> (i32, i32) {
    %c0_i32 = arith.constant 0 : i32
    %c0_i32_0 = arith.constant 0 : i32
    %c0_i32_1 = arith.constant 0 : i32
    return %c0_i32, %c0_i32_0 : i32, i32
  }
  func.func @transform_3(%arg0: i32) -> (i32, i32) {
    %c0_i32 = arith.constant 0 : i32
    %c0_i32_0 = arith.constant 0 : i32
    return %arg0, %c0_i32 : i32, i32
  }
}

</mosaic_0001>

<llo_original>
// kernel: tpu_custom_call.1
$region0: #{tpu_custom_call.1}
  #allocation0 [shape = 'u32[]', space=smem, size = 0x4, offset = 0x4, fixed_abs, tag = 'smem constant byte address 0x4 - core index']
  #allocation1 [shape = 'u32[144,128]{1,0:T(1,128)}', space=vmem, size = 0x12000, scoped, tag = 'internal scratch']
  %s0 = inlined_call_operand.hbm [shape: f32[96,128], index: 0, kind: input, shape index: {}]
  %s1 = inlined_call_operand.hbm [shape: f32[32,48], index: 1, kind: input, shape index: {}]
  %s2 = inlined_call_operand.hbm [shape: f32[128,256], index: 2, kind: input, shape index: {}]
  %s3 = inlined_call_operand.hbm [shape: f32[64,256], index: 3, kind: output, shape index: {}]
  %s4 = sld [smem:[#allocation0]]
  $region57: #{tpu_custom_call.1} parent=0
    _
  %s6 = ssub.s32 1, %s4
  %s7 = scalar_select 0, %s6, %s4
  $region1: #{tpu_custom_call.1} parent=0
    #allocation2 [shape = 'u8[49152]{0}', space=vmem, size = 0xc000, scoped, tag = 'input window, operand 0']
    #allocation3 [shape = 's32[2]{0}', space=sflag, size = 0x8, scoped, tag = 'scoped memory for tpu_custom_call.1']
    #allocation4 [shape = 's32[2]{0}', space=sflag, size = 0x8, scoped, tag = 'scoped memory for tpu_custom_call.1']
    #allocation5 [shape = 'u8[16384]{0}', space=vmem, size = 0x4000, scoped, tag = 'input window, operand 1, single buffered']
    #allocation6 [shape = 's32[1]{0}', space=sflag, size = 0x4, scoped, tag = 'scoped memory for tpu_custom_call.1']
    #allocation7 [shape = 'u8[131072]{0}', space=vmem, size = 0x20000, scoped, tag = 'input window, operand 2, single buffered']
    #allocation8 [shape = 'u8[65536]{0}', space=vmem, size = 0x10000, scoped, tag = 'output window, operand 0']
    %8 = vsyncpa [#allocation3], 0
    %s9 = scalar_lea.sflag [#allocation3], 1
    %10 = vsyncpa %s9, 0
    %11 = vsyncpa [#allocation6], 0
    %12 = vsyncpa [#allocation4], 0
    %s13 = scalar_lea.sflag [#allocation4], 1
    %14 = vsyncpa %s13, 0
    loop: start=0, step=1, limit=4
    $region2: #{tpu_custom_call.1} parent=1 // loop_pre_header
      _
    $region3: #{tpu_custom_call.1} parent=1 // loop_header
      %s16 = sphi 0, %s20
      %p17 = scmp.ge.s32.totalorder %s16, 4
      %s26 = sphi 0, %s28
      %s29 = sphi 0, %s26
      %s30 = sphi 0, %s29
      %s46 = sphi 0, %s30
      %s50 = sphi 0, %s50
      %s52 = sphi 0, %s50
      %s53 = sphi 0, %s52
      %s67 = sphi 0, %s53
      %s71 = sphi 0, %s71
      %s73 = sphi 0, %s71
      %s74 = sphi 0, %s73
      %s88 = sphi 0, %s74
      %s94 = sphi 0, %s96
      %s97 = sphi 0, %s94
      %s98 = sphi 0, %s97
      %s114 = sphi 0, %s98
    $region4: #{tpu_custom_call.1} parent=1 // loop_header_branch
      %19 = sbr.rel (%p17) target = $region8
    $region5: #{tpu_custom_call.1} parent=1 // loop_body
      %s21 = ssub.s32 %s16, 1
      %s22 = ssub.s32 %s16, 2
      %s23 = sadd.s32 %s16, 1
      %s24 = ssub.s32 %s16, %s23
      %p25 = scmp.eq.s32.totalorder %s24, 0
      %s27 = sadd.s32 %s26, 1
      %s28 = scalar_select %p25, %s26, %s27
      %p31 = pneg %p25
      %p32 = scmp.eq.s32.totalorder %s16, 1
      %p33 = por %p31, %p32
      %p34 = scmp.ne.s32.totalorder %s26, %s29
      %p35 = scmp.eq.s32.totalorder %s16, 0
      %p36 = por %p34, %p35
      %p37 = scmp.ne.s32.totalorder %s26, %s29
      %p38 = scmp.eq.s32.totalorder %s21, 1
      %p39 = por %p37, %p38
      %p40 = scmp.ne.s32.totalorder %s29, %s30
      %p41 = scmp.eq.s32.totalorder %s21, 0
      %p42 = por %p40, %p41
      %p43 = scmp.ne.s32.totalorder %s29, %s30
      %p44 = scmp.eq.s32.totalorder %s22, 1
      %p45 = por %p43, %p44
      %p47 = scmp.ne.s32.totalorder %s30, %s46
      %p48 = scmp.eq.s32.totalorder %s22, 0
      %p49 = por %p47, %p48
      %s51 = sadd.s32 %s50, 1
      %p54 = scmp.eq.s32.totalorder %s16, 1
      %p55 = scmp.ne.s32.totalorder %s50, %s52
      %p56 = scmp.eq.s32.totalorder %s16, 0
      %p57 = por %p55, %p56
      %p58 = scmp.ne.s32.totalorder %s50, %s52
      %p59 = scmp.eq.s32.totalorder %s21, 1
      %p60 = por %p58, %p59
      %p61 = scmp.ne.s32.totalorder %s52, %s53
      %p62 = scmp.eq.s32.totalorder %s21, 0
      %p63 = por %p61, %p62
      %p64 = scmp.ne.s32.totalorder %s52, %s53
      %p65 = scmp.eq.s32.totalorder %s22, 1
      %p66 = por %p64, %p65
      %p68 = scmp.ne.s32.totalorder %s53, %s67
      %p69 = scmp.eq.s32.totalorder %s22, 0
      %p70 = por %p68, %p69
      %s72 = sadd.s32 %s71, 1
      %p75 = scmp.eq.s32.totalorder %s16, 1
      %p76 = scmp.ne.s32.totalorder %s71, %s73
      %p77 = scmp.eq.s32.totalorder %s16, 0
      %p78 = por %p76, %p77
      %p79 = scmp.ne.s32.totalorder %s71, %s73
      %p80 = scmp.eq.s32.totalorder %s21, 1
      %p81 = por %p79, %p80
      %p82 = scmp.ne.s32.totalorder %s73, %s74
      %p83 = scmp.eq.s32.totalorder %s21, 0
      %p84 = por %p82, %p83
      %p85 = scmp.ne.s32.totalorder %s73, %s74
      %p86 = scmp.eq.s32.totalorder %s22, 1
      %p87 = por %p85, %p86
      %p89 = scmp.ne.s32.totalorder %s74, %s88
      %p90 = scmp.eq.s32.totalorder %s22, 0
      %p91 = por %p89, %p90
      %s92 = ssub.s32 %s16, %s23
      %p93 = scmp.eq.s32.totalorder %s92, 0
      %s95 = sadd.s32 %s94, 1
      %s96 = scalar_select %p93, %s94, %s95
      %p99 = pneg %p93
      %p100 = scmp.eq.s32.totalorder %s16, 1
      %p101 = por %p99, %p100
      %p102 = scmp.ne.s32.totalorder %s94, %s97
      %p103 = scmp.eq.s32.totalorder %s16, 0
      %p104 = por %p102, %p103
      %p105 = scmp.ne.s32.totalorder %s94, %s97
      %p106 = scmp.eq.s32.totalorder %s21, 1
      %p107 = por %p105, %p106
      %p108 = scmp.ne.s32.totalorder %s97, %s98
      %p109 = scmp.eq.s32.totalorder %s21, 0
      %p110 = por %p108, %p109
      %p111 = scmp.ne.s32.totalorder %s97, %s98
      %p112 = scmp.eq.s32.totalorder %s22, 1
      %p113 = por %p111, %p112
      %p115 = scmp.ne.s32.totalorder %s98, %s114
      %p116 = scmp.eq.s32.totalorder %s22, 0
      %p117 = por %p115, %p116
      %p118 = scmp.le.s32.totalorder 1, %s16
      %p119 = scmp.lt.s32.totalorder %s16, 3
      %p120 = pnand %p118, %p119
      %p121 = pneg %p120
      // Predicated region
      $region9: #{tpu_custom_call.1} parent=5 // pred_check
        _
      $region10: #{tpu_custom_call.1} parent=5 // pred_check_branch
        %123 = sbr.rel (%p120) target = $region12
      $region11: #{tpu_custom_call.1} parent=5 // pred_region
        %s124 = ssub.s32 %s16, 1
        // Predicated region
        $region13: #{tpu_custom_call.1} parent=11 // pred_check
          %p125 = pneg %p63
        $region14: #{tpu_custom_call.1} parent=11 // pred_check_branch
          %127 = sbr.rel (%p125) target = $region16
        $region15: #{tpu_custom_call.1} parent=11 // pred_region
          %s129 = ssub.s32 512, 512
          %130 = vsyncadd [#allocation6], %s129
          %s131 = sshll.u32 [#allocation5], 4
          %s132 = int_to_ptr.vmem [resolvable:$true] %s131
          %137 = dma.hbm_to_vmem [thread:$0]  %s1, 512, %s132, [#allocation6], 128, 128, 8
        $region16: #{tpu_custom_call.1} parent=11 // pred_fallthru
          _
        // Predicated region
        $region17: #{tpu_custom_call.1} parent=11 // pred_check
          %p138 = pneg %p84
        $region18: #{tpu_custom_call.1} parent=11 // pred_check_branch
          %140 = sbr.rel (%p138) target = $region20
        $region19: #{tpu_custom_call.1} parent=11 // pred_region
          %s142 = ssub.s32 4096, 4096
          %143 = vsyncadd [#allocation6], %s142
          %s144 = sshll.u32 [#allocation7], 4
          %s145 = int_to_ptr.vmem [resolvable:$true] %s144
          %150 = dma.hbm_to_vmem [thread:$0]  %s2, 4096, %s145, [#allocation6], 256, 256, 16
        $region20: #{tpu_custom_call.1} parent=11 // pred_fallthru
          _
      $region12: #{tpu_custom_call.1} parent=5 // pred_fallthru
        _
      %p151 = scmp.lt.s32.totalorder %s16, 2
      // Predicated region
      $region21: #{tpu_custom_call.1} parent=5 // pred_check
        %p152 = pneg %p151
      $region22: #{tpu_custom_call.1} parent=5 // pred_check_branch
        %154 = sbr.rel (%p152) target = $region24
      $region23: #{tpu_custom_call.1} parent=5 // pred_region
        // Predicated region
        $region25: #{tpu_custom_call.1} parent=23 // pred_check
          %p155 = pneg %p36
        $region26: #{tpu_custom_call.1} parent=23 // pred_check_branch
          %157 = sbr.rel (%p155) target = $region28
        $region27: #{tpu_custom_call.1} parent=23 // pred_region
          %s158 = sand.u32 %s26, 1
          %s159 = scalar_lea.sflag [#allocation3], %s158
          %s160 = sand.u32 %s26, 1
          %s161 = smul.addr %s160, 48
          %s162 = scalar_lea.vmem [#allocation2], %s161
          %s163 = smul.u32 6, %s16
          %s165 = ssub.s32 768, 768
          %166 = vsyncadd %s159, %s165
          %s167 = smul.addr %s163, 128
          %s168 = scalar_lea.hbm %s0, %s167
          %s169 = sshll.u32 %s162, 4
          %s170 = int_to_ptr.vmem [resolvable:$true] %s169
          %175 = dma.hbm_to_vmem [thread:$0]  %s168, 768, %s170, %s159, 128, 128, 8
        $region28: #{tpu_custom_call.1} parent=23 // pred_fallthru
          _
      $region24: #{tpu_custom_call.1} parent=5 // pred_fallthru
        _
      %p176 = scmp.le.s32.totalorder 1, %s16
      %p177 = scmp.lt.s32.totalorder %s16, 3
      %p178 = pnand %p176, %p177
      %p179 = pneg %p178
      // Predicated region
      $region29: #{tpu_custom_call.1} parent=5 // pred_check
        _
      $region30: #{tpu_custom_call.1} parent=5 // pred_check_branch
        %181 = sbr.rel (%p178) target = $region32
      $region31: #{tpu_custom_call.1} parent=5 // pred_region
        %s182 = ssub.s32 %s16, 1
        %s183 = sand.u32 %s29, 1
        %s184 = scalar_lea.sflag [#allocation3], %s183
        %s185 = sand.u32 %s29, 1
        %s186 = smul.addr %s185, 48
        %s187 = scalar_lea.vmem [#allocation2], %s186
        // Predicated region
        $region33: #{tpu_custom_call.1} parent=31 // pred_check
          %p188 = pneg %p42
        $region34: #{tpu_custom_call.1} parent=31 // pred_check_branch
          %190 = sbr.rel (%p188) target = $region36
        $region35: #{tpu_custom_call.1} parent=31 // pred_region
          %191 = dma.done %s184, 768
        $region36: #{tpu_custom_call.1} parent=31 // pred_fallthru
          _
        // Predicated region
        $region37: #{tpu_custom_call.1} parent=31 // pred_check
          %p192 = pneg %p63
        $region38: #{tpu_custom_call.1} parent=31 // pred_check_branch
          %194 = sbr.rel (%p192) target = $region40
        $region39: #{tpu_custom_call.1} parent=31 // pred_region
          %195 = dma.done [#allocation6], 512
        $region40: #{tpu_custom_call.1} parent=31 // pred_fallthru
          _
        // Predicated region
        $region41: #{tpu_custom_call.1} parent=31 // pred_check
          %p196 = pneg %p84
        $region42: #{tpu_custom_call.1} parent=31 // pred_check_branch
          %198 = sbr.rel (%p196) target = $region44
        $region43: #{tpu_custom_call.1} parent=31 // pred_region
          %199 = dma.done [#allocation6], 4096
        $region44: #{tpu_custom_call.1} parent=31 // pred_fallthru
          _
        %s200 = sand.u32 %s29, 1
        %s201 = scalar_lea.sflag [#allocation3], %s200
        %s202 = sand.u32 %s29, 1
        %s203 = smul.addr %s202, 48
        %s204 = scalar_lea.vmem [#allocation2], %s203
        %p205 = pneg %p42
        %p206 = pneg %p39
        %p207 = pneg %p63
        %p208 = pneg %p60
        %p209 = pneg %p84
        %p210 = pneg %p81
        %p211 = pneg %p110
        %p212 = pneg %p107
        %s213 = sand.u32 %s97, 1
        %s214 = scalar_lea.sflag [#allocation4], %s213
        %s215 = sand.u32 %s97, 1
        %s216 = smul.addr %s215, 64
        %s217 = scalar_lea.vmem [#allocation8], %s216
        %s218 = smul.u32 6, %s21
        %s219 = smul.u32 4, %s21
        %v220 = vld [vmem:[#allocation5] sm:$0xff]
        %v221 = vld [vmem:[#allocation5 + $0x8] sm:$0xff]
        %v222 = vld [vmem:[#allocation5 + $0x10] sm:$0xff]
        %v223 = vld [vmem:[#allocation5 + $0x18] sm:$0xff]
        %v224 = vld [vmem:[%s187] sm:$0xff]
        %v225 = vld [vmem:[%s187 + $0x8] sm:$0xff]
        %v226 = vld [vmem:[%s187 + $0x10] sm:$0xff]
        %v227 = vld [vmem:[%s187 + $0x18] sm:$0xff]
        %v228 = vld [vmem:[%s187 + $0x20] sm:$0xff]
        %v229 = vld [vmem:[%s187 + $0x28] sm:$0xff]
        %vm230 = vcmask 392192
        %v232 = vsel %vm230, %v220, 0
        %v235 = vsel %vm230, %v221, 0
        %v238 = vsel %vm230, %v222, 0
        %v241 = vsel %vm230, %v223, 0
        %243 = vmatprep.subr.mxu0 0.0
        %244 = vmatpush1.msra.mxu0 0.0
        %245 = vmatprep.subr.mxu0 0.0
        %246 = vmatpush1.msra.mxu0 0.0
        %247 = vmatprep.subr.mxu0 0.0
        %248 = vmatpush1.msra.mxu0 0.0
        %249 = vmatprep.subr.mxu0 0.0
        %250 = vmatpush1.msra.mxu0 0.0
        %251 = vmatprep.subr.mxu0 0.0
        %252 = vmatpush1.msra.mxu0 0.0
        %253 = vmatprep.subr.mxu0 0.0
        %254 = vmatpush1.msra.mxu0 0.0
        %255 = vmatprep.subr.mxu0 0.0
        %256 = vmatpush1.msra.mxu0 0.0
        %257 = vmatprep.subr.mxu0 0.0
        %258 = vmatpush1.msra.mxu0 0.0
        %259 = vmatprep.subr.mxu0 0.0
        %260 = vmatpush1.msra.mxu0 0.0
        %261 = vmatprep.subr.mxu0 0.0
        %262 = vmatpush1.msra.mxu0 0.0
        %263 = vmatprep.subr.mxu0 0.0
        %264 = vmatpush1.msra.mxu0 %v229
        %265 = vmatprep.subr.mxu0 0.0
        %266 = vmatpush1.msra.mxu0 %v228
        %267 = vmatprep.subr.mxu0 0.0
        %268 = vmatpush1.msra.mxu0 %v227
        %269 = vmatprep.subr.mxu0 0.0
        %270 = vmatpush1.msra.mxu0 %v226
        %271 = vmatprep.subr.mxu0 0.0
        %272 = vmatpush1.msra.mxu0 %v225
        %273 = vmatprep.subr.mxu0 0.0
        %274 = vmatpush1.msra.mxu0 %v224
        %275 = vmatprep.subr.mxu0 0.0
        %276 = vmatpush2.msra.mxu0 0.0
        %277 = vmatprep.subr.mxu0 0.0
        %278 = vmatpush2.msra.mxu0 0.0
        %279 = vmatprep.subr.mxu0 0.0
        %280 = vmatpush2.msra.mxu0 0.0
        %281 = vmatprep.subr.mxu0 0.0
        %282 = vmatpush2.msra.mxu0 0.0
        %283 = vmatprep.subr.mxu0 0.0
        %284 = vmatpush2.msra.mxu0 0.0
        %285 = vmatprep.subr.mxu0 0.0
        %286 = vmatpush2.msra.mxu0 0.0
        %287 = vmatprep.subr.mxu0 0.0
        %288 = vmatpush2.msra.mxu0 0.0
        %289 = vmatprep.subr.mxu0 0.0
        %290 = vmatpush2.msra.mxu0 0.0
        %291 = vmatprep.subr.mxu0 0.0
        %292 = vmatpush2.msra.mxu0 0.0
        %293 = vmatprep.subr.mxu0 0.0
        %294 = vmatpush2.msra.mxu0 0.0
        %295 = vmatprep.subr.mxu0 0.0
        %296 = vmatpush2.msra.mxu0 0.0
        %297 = vmatprep.subr.mxu0 0.0
        %298 = vmatpush2.msra.mxu0 0.0
        %299 = vmatprep.subr.mxu0 0.0
        %300 = vmatpush2.msra.mxu0 0.0
        %301 = vmatprep.subr.mxu0 0.0
        %302 = vmatpush2.msra.mxu0 0.0
        %303 = vmatprep.subr.mxu0 0.0
        %304 = vmatpush2.msra.mxu0 0.0
        %305 = vmatprep.subr.mxu0 0.0
        %306 = vmatpush2.msra.mxu0 0.0
        %307 = vmatprep.mubr.f32.mxu0 0.0
        %308 = vmatmul.mubr.f32.gmra.mxu0 %v232
        %v309 = vpop.f32.mrf.mxu0
        %v310 = vadd.f32 0.0, %v309
        %v311 = vpop.f32.mrf.mxu0
        %312 = vmatprep.mubr.f32.mxu0 0.0
        %313 = vmatmul.mubr.f32.gmra.mxu0 %v235
        %v314 = vpop.f32.mrf.mxu0
        %v315 = vadd.f32 0.0, %v314
        %v316 = vpop.f32.mrf.mxu0
        %317 = vmatprep.mubr.f32.mxu0 0.0
        %318 = vmatmul.mubr.f32.gmra.mxu0 %v238
        %v319 = vpop.f32.mrf.mxu0
        %v320 = vadd.f32 0.0, %v319
        %v321 = vpop.f32.mrf.mxu0
        %322 = vmatprep.mubr.f32.mxu0 0.0
        %323 = vmatmul.mubr.f32.gmra.mxu0 %v241
        %v324 = vpop.f32.mrf.mxu0
        %v325 = vadd.f32 0.0, %v324
        %v326 = vpop.f32.mrf.mxu0
        %327 = vdwg.mxu0
        %v328 = vld [vmem:[#allocation7] sm:$0xff]
        %v329 = vld [vmem:[#allocation7 + $0x8] sm:$0xff]
        %v330 = vld [vmem:[#allocation7 + $0x10] sm:$0xff]
        %v331 = vld [vmem:[#allocation7 + $0x18] sm:$0xff]
        %v332 = vld [vmem:[#allocation7 + $0x20] sm:$0xff]
        %v333 = vld [vmem:[#allocation7 + $0x28] sm:$0xff]
        %v334 = vld [vmem:[#allocation7 + $0x30] sm:$0xff]
        %v335 = vld [vmem:[#allocation7 + $0x38] sm:$0xff]
        %v336 = vld [vmem:[#allocation7 + $0x40] sm:$0xff]
        %v337 = vld [vmem:[#allocation7 + $0x48] sm:$0xff]
        %v338 = vld [vmem:[#allocation7 + $0x50] sm:$0xff]
        %v339 = vld [vmem:[#allocation7 + $0x58] sm:$0xff]
        %v340 = vld [vmem:[#allocation7 + $0x60] sm:$0xff]
        %v341 = vld [vmem:[#allocation7 + $0x68] sm:$0xff]
        %v342 = vld [vmem:[#allocation7 + $0x70] sm:$0xff]
        %v343 = vld [vmem:[#allocation7 + $0x78] sm:$0xff]
        %v344 = vld [vmem:[#allocation7 + $0x80] sm:$0xff]
        %v345 = vld [vmem:[#allocation7 + $0x88] sm:$0xff]
        %v346 = vld [vmem:[#allocation7 + $0x90] sm:$0xff]
        %v347 = vld [vmem:[#allocation7 + $0x98] sm:$0xff]
        %v348 = vld [vmem:[#allocation7 + $0xa0] sm:$0xff]
        %v349 = vld [vmem:[#allocation7 + $0xa8] sm:$0xff]
        %v350 = vld [vmem:[#allocation7 + $0xb0] sm:$0xff]
        %v351 = vld [vmem:[#allocation7 + $0xb8] sm:$0xff]
        %v352 = vld [vmem:[#allocation7 + $0xc0] sm:$0xff]
        %v353 = vld [vmem:[#allocation7 + $0xc8] sm:$0xff]
        %v354 = vld [vmem:[#allocation7 + $0xd0] sm:$0xff]
        %v355 = vld [vmem:[#allocation7 + $0xd8] sm:$0xff]
        %v356 = vld [vmem:[#allocation7 + $0xe0] sm:$0xff]
        %v357 = vld [vmem:[#allocation7 + $0xe8] sm:$0xff]
        %v358 = vld [vmem:[#allocation7 + $0xf0] sm:$0xff]
        %v359 = vld [vmem:[#allocation7 + $0xf8] sm:$0xff]
        %360 = vmatprep.subr.mxu0 %v359
        %361 = vmatpush1.msra.mxu0 %v358
        %362 = vmatprep.subr.mxu0 %v357
        %363 = vmatpush1.msra.mxu0 %v356
        %364 = vmatprep.subr.mxu0 %v355
        %365 = vmatpush1.msra.mxu0 %v354
        %366 = vmatprep.subr.mxu0 %v353
        %367 = vmatpush1.msra.mxu0 %v352
        %368 = vmatprep.subr.mxu0 %v351
        %369 = vmatpush1.msra.mxu0 %v350
        %370 = vmatprep.subr.mxu0 %v349
        %371 = vmatpush1.msra.mxu0 %v348
        %372 = vmatprep.subr.mxu0 %v347
        %373 = vmatpush1.msra.mxu0 %v346
        %374 = vmatprep.subr.mxu0 %v345
        %375 = vmatpush1.msra.mxu0 %v344
        %376 = vmatprep.subr.mxu0 %v343
        %377 = vmatpush1.msra.mxu0 %v342
        %378 = vmatprep.subr.mxu0 %v341
        %379 = vmatpush1.msra.mxu0 %v340
        %380 = vmatprep.subr.mxu0 %v339
        %381 = vmatpush1.msra.mxu0 %v338
        %382 = vmatprep.subr.mxu0 %v337
        %383 = vmatpush1.msra.mxu0 %v336
        %384 = vmatprep.subr.mxu0 %v335
        %385 = vmatpush1.msra.mxu0 %v334
        %386 = vmatprep.subr.mxu0 %v333
        %387 = vmatpush1.msra.mxu0 %v332
        %388 = vmatprep.subr.mxu0 %v331
        %389 = vmatpush1.msra.mxu0 %v330
        %390 = vmatprep.subr.mxu0 %v329
        %391 = vmatpush1.msra.mxu0 %v328
        %392 = vmatprep.subr.mxu0 0.0
        %393 = vmatpush2.msra.mxu0 0.0
        %394 = vmatprep.subr.mxu0 0.0
        %395 = vmatpush2.msra.mxu0 0.0
        %396 = vmatprep.subr.mxu0 0.0
        %397 = vmatpush2.msra.mxu0 0.0
        %398 = vmatprep.subr.mxu0 0.0
        %399 = vmatpush2.msra.mxu0 0.0
        %400 = vmatprep.subr.mxu0 0.0
        %401 = vmatpush2.msra.mxu0 0.0
        %402 = vmatprep.subr.mxu0 0.0
        %403 = vmatpush2.msra.mxu0 0.0
        %404 = vmatprep.subr.mxu0 0.0
        %405 = vmatpush2.msra.mxu0 0.0
        %406 = vmatprep.subr.mxu0 0.0
        %407 = vmatpush2.msra.mxu0 0.0
        %408 = vmatprep.subr.mxu0 0.0
        %409 = vmatpush2.msra.mxu0 0.0
        %410 = vmatprep.subr.mxu0 0.0
        %411 = vmatpush2.msra.mxu0 0.0
        %412 = vmatprep.subr.mxu0 0.0
        %413 = vmatpush2.msra.mxu0 0.0
        %414 = vmatprep.subr.mxu0 0.0
        %415 = vmatpush2.msra.mxu0 0.0
        %416 = vmatprep.subr.mxu0 0.0
        %417 = vmatpush2.msra.mxu0 0.0
        %418 = vmatprep.subr.mxu0 0.0
        %419 = vmatpush2.msra.mxu0 0.0
        %420 = vmatprep.subr.mxu0 0.0
        %421 = vmatpush2.msra.mxu0 0.0
        %422 = vmatprep.subr.mxu0 0.0
        %423 = vmatpush2.msra.mxu0 0.0
        %424 = vmatprep.mubr.f32.mxu0 0.0
        %425 = vmatmul.mubr.f32.gmra.mxu0 %v310
        %v426 = vpop.f32.mrf.mxu0
        %v427 = vadd.f32 0.0, %v426
        %v428 = vpop.f32.mrf.mxu0
        %v429 = vadd.f32 0.0, %v428
        %430 = vmatprep.mubr.f32.mxu0 0.0
        %431 = vmatmul.mubr.f32.gmra.mxu0 %v315
        %v432 = vpop.f32.mrf.mxu0
        %v433 = vadd.f32 0.0, %v432
        %v434 = vpop.f32.mrf.mxu0
        %v435 = vadd.f32 0.0, %v434
        %436 = vmatprep.mubr.f32.mxu0 0.0
        %437 = vmatmul.mubr.f32.gmra.mxu0 %v320
        %v438 = vpop.f32.mrf.mxu0
        %v439 = vadd.f32 0.0, %v438
        %v440 = vpop.f32.mrf.mxu0
        %v441 = vadd.f32 0.0, %v440
        %442 = vmatprep.mubr.f32.mxu0 0.0
        %443 = vmatmul.mubr.f32.gmra.mxu0 %v325
        %v444 = vpop.f32.mrf.mxu0
        %v445 = vadd.f32 0.0, %v444
        %v446 = vpop.f32.mrf.mxu0
        %v447 = vadd.f32 0.0, %v446
        %448 = vdwg.mxu0
        %449 = vst [vmem:[%s217] sm:$0xff] %v427
        %450 = vst [vmem:[%s217 + $0x8] sm:$0xff] %v429
        %451 = vst [vmem:[%s217 + $0x10] sm:$0xff] %v433
        %452 = vst [vmem:[%s217 + $0x18] sm:$0xff] %v435
        %453 = vst [vmem:[%s217 + $0x20] sm:$0xff] %v439
        %454 = vst [vmem:[%s217 + $0x28] sm:$0xff] %v441
        %455 = vst [vmem:[%s217 + $0x30] sm:$0xff] %v445
        %456 = vst [vmem:[%s217 + $0x38] sm:$0xff] %v447
        %s457 = sand.u32 %s97, 1
        %s458 = scalar_lea.sflag [#allocation4], %s457
        %s459 = sand.u32 %s97, 1
        %s460 = smul.addr %s459, 64
        %s461 = scalar_lea.vmem [#allocation8], %s460
        // Predicated region
        $region45: #{tpu_custom_call.1} parent=31 // pred_check
          %p462 = pneg %p107
        $region46: #{tpu_custom_call.1} parent=31 // pred_check_branch
          %464 = sbr.rel (%p462) target = $region48
        $region47: #{tpu_custom_call.1} parent=31 // pred_region
          %s465 = smul.u32 4, %s21
          %s467 = ssub.s32 1024, 1024
          %468 = vsyncadd %s458, %s467
          %s469 = smul.addr %s465, 2
          %s470 = smul.addr %s469, 128
          %s471 = scalar_lea.hbm %s3, %s470
          %s472 = sshll.u32 %s461, 4
          %s473 = int_to_ptr.vmem [resolvable:$true] %s472
          %478 = dma.vmem_to_hbm [thread:$0]  %s473, 1024, %s471, %s458, 256, 256, 16
        $region48: #{tpu_custom_call.1} parent=31 // pred_fallthru
          _
      $region32: #{tpu_custom_call.1} parent=5 // pred_fallthru
        _
      %p479 = scmp.le.s32.totalorder 2, %s16
      // Predicated region
      $region49: #{tpu_custom_call.1} parent=5 // pred_check
        %p480 = pneg %p479
      $region50: #{tpu_custom_call.1} parent=5 // pred_check_branch
        %482 = sbr.rel (%p480) target = $region52
      $region51: #{tpu_custom_call.1} parent=5 // pred_region
        %s483 = ssub.s32 %s16, 2
        // Predicated region
        $region53: #{tpu_custom_call.1} parent=51 // pred_check
          %p484 = pneg %p113
        $region54: #{tpu_custom_call.1} parent=51 // pred_check_branch
          %486 = sbr.rel (%p484) target = $region56
        $region55: #{tpu_custom_call.1} parent=51 // pred_region
          %s487 = sand.u32 %s98, 1
          %s488 = scalar_lea.sflag [#allocation4], %s487
          %s489 = sand.u32 %s98, 1
          %s490 = smul.addr %s489, 64
          %s491 = scalar_lea.vmem [#allocation8], %s490
          %492 = dma.done %s488, 1024
        $region56: #{tpu_custom_call.1} parent=51 // pred_fallthru
          _
      $region52: #{tpu_custom_call.1} parent=5 // pred_fallthru
        _
    $region6: #{tpu_custom_call.1} parent=1 // loop_footer
      %s20 = sadd.s32 1, %s16
    $region7: #{tpu_custom_call.1} parent=1 // loop_footer_branch
      %15 = sbr.rel target = $region3
    $region8: #{tpu_custom_call.1} parent=1 // loop_exit
      _
    %493 = vsyncpa [#allocation3], 1
    %s494 = scalar_lea.sflag [#allocation3], 1
    %495 = vsyncpa %s494, 1
    %496 = vsyncpa [#allocation6], 1
    %497 = vsyncpa [#allocation4], 1
    %s498 = scalar_lea.sflag [#allocation4], 1
    %499 = vsyncpa %s498, 1

</llo_original>
